<compile_context>
chip_gen: v7x
topology: tpu7x:2x2x1
jax: 0.10.0
libtpu: 0.0.40
codegen_flags: <defaults>
</compile_context>

<pallas_src>
import functools

import jax
import jax.numpy as jnp
from jax.experimental import pallas as pl
from jax.experimental.pallas import tpu as pltpu


def _vpinn_low_kernel(nlayers, x_ref, y_ref, *refs):
    """refs = [W0, b0, W1, b1, ..., W_last, b_last, out_ref].

    Weights are (in, out) (transpose of torch nn.Linear.weight), biases (1, out).
    Computes out = y + sigmoid-MLP(x).  Matmul operand dtype follows the weight
    dtype (bf16 or f32, decided by the wrapper); accumulation is always f32.
    """
    out_ref = refs[-1]
    param_refs = refs[:-1]

    h = x_ref[...]
    num_linear = nlayers + 2  # first + nlayers hidden + last, each followed by sigmoid
    for li in range(num_linear):
        w_ref = param_refs[2 * li]
        b = param_refs[2 * li + 1][...].astype(jnp.float32)
        z = jnp.dot(h.astype(w_ref.dtype), w_ref[...],
                    preferred_element_type=jnp.float32) + b
        # sigmoid(z) == 0.5 * tanh(0.5 * z) + 0.5  -> one EUP push + cheap VALU ops
        h = 0.5 * jnp.tanh(0.5 * z) + 0.5          # f32

    out_ref[...] = (y_ref[...].astype(jnp.float32) + h).astype(out_ref.dtype)


def init_vpinn_low_params(key, n, d, nlayers, width, dtype=jnp.float32):
    """Parameters matching _FCNet layer shapes.

    Returns a flat list [W0, b0, ..., W_last, b_last] with W already (in, out).
    """
    dims = [d] + [width] * (nlayers + 1) + [n - d]
    params = []
    for li in range(len(dims) - 1):
        fan_in, fan_out = dims[li], dims[li + 1]
        key, kw, kb = jax.random.split(key, 3)
        bound = 1.0 / (fan_in ** 0.5)  # torch nn.Linear default init range
        w = jax.random.uniform(kw, (fan_in, fan_out), dtype, -bound, bound)
        b = jax.random.uniform(kb, (1, fan_out), dtype, -bound, bound)
        params += [w, b]
    return params


def vpinn_low_forward(xy, params, n, d, nlayers, *, block_b=1024,
                      compute_in_bf16=True):
    """xy: (B, n).  Returns (B, n) = hstack([x, y + m(x)])."""
    B = xy.shape[0]
    nd = n - d

    x = xy[:, :d]      # wrapper-side slices (free layout ops, not in-kernel)
    y = xy[:, d:]

    # Cast once in the wrapper: weights (and x) in bf16 for the MXU path so the
    # resident weights are never re-packed inside the grid loop.
    if compute_in_bf16:
        x_in = x.astype(jnp.bfloat16)
        kparams = [p.astype(jnp.bfloat16) if i % 2 == 0 else p.astype(jnp.float32)
                   for i, p in enumerate(params)]
    else:
        x_in = x
        kparams = [p.astype(jnp.float32) for p in params]
    y_in = y

    # Batch tile: multiple of 8 sublanes when tiling, full B otherwise.
    tb = min(block_b, B)
    if tb < B:
        tb = max(8, (tb // 8) * 8)
    n_blocks = -(-B // tb)
    Bp = n_blocks * tb
    if Bp != B:
        pad = Bp - B
        x_in = jnp.pad(x_in, ((0, pad), (0, 0)))
        y_in = jnp.pad(y_in, ((0, pad), (0, 0)))

    kernel = functools.partial(_vpinn_low_kernel, nlayers)

    in_specs = [
        pl.BlockSpec((tb, d), lambda i: (i, 0)),   # x tile
        pl.BlockSpec((tb, nd), lambda i: (i, 0)),  # y tile
    ]
    # Weights/biases: full array, same block every grid step (stay resident).
    for p in kparams:
        in_specs.append(pl.BlockSpec(p.shape, lambda i: (0, 0)))

    out_spec = pl.BlockSpec((tb, nd), lambda i: (i, 0))

    yh = pl.pallas_call(
        kernel,
        out_shape=jax.ShapeDtypeStruct((Bp, nd), xy.dtype),
        grid_spec=pltpu.PrefetchScalarGridSpec(
            num_scalar_prefetch=0,
            grid=(n_blocks,),
            in_specs=in_specs,
            out_specs=out_spec,
        ),
        compiler_params=pltpu.CompilerParams(
            dimension_semantics=("parallel",)),
    )(x_in, y_in, *kparams)

    yh = yh[:B]
    return jnp.concatenate([x, yh], axis=1)


def vpinn_low_reference(xy, params, n, d, nlayers):
    """Pure-JAX f32 reference for the correctness check."""
    x = xy[:, :d]
    y = xy[:, d:]
    h = x
    num_linear = nlayers + 2
    for li in range(num_linear):
        w = params[2 * li]
        b = params[2 * li + 1]
        h = jax.nn.sigmoid(h @ w + b)
    return jnp.concatenate([x, y + h], axis=1)


if __name__ == "__main__":
    # Small shapes consistent with VPINNMod_LOW(n, d, nlayers, width).
    # B chosen non-multiple of the batch tile to exercise padding + multi-step grid.
    B, n, d, nlayers, width = 72, 16, 8, 2, 32

    key = jax.random.PRNGKey(0)
    key, kx = jax.random.split(key)
    xy = jax.random.normal(kx, (B, n), jnp.float32)

    params = init_vpinn_low_params(key, n, d, nlayers, width)

    ref = vpinn_low_reference(xy, params, n, d, nlayers)

    # Exact f32 path (tight tolerance); block_b=16 -> multi-block grid + padding.
    out_f32 = vpinn_low_forward(xy, params, n, d, nlayers,
                                block_b=16, compute_in_bf16=False)
    out_f32 = jax.block_until_ready(out_f32)
    assert out_f32.shape == (B, n)
    assert jnp.allclose(out_f32, ref, atol=1e-5, rtol=1e-5), "f32 mismatch vs reference"

    # bf16-operand MXU path (default for v6e/v7x); f32 accumulation.
    out_bf16 = vpinn_low_forward(xy, params, n, d, nlayers,
                                 block_b=16, compute_in_bf16=True)
    out_bf16 = jax.block_until_ready(out_bf16)
    assert out_bf16.shape == (B, n)
    assert jnp.allclose(out_bf16, ref, atol=5e-2, rtol=5e-2), "bf16 path drifted too far"

    # Single-block path (tb == B, no padding).
    out_one = vpinn_low_forward(xy, params, n, d, nlayers, compute_in_bf16=True)
    out_one = jax.block_until_ready(out_one)
    assert jnp.allclose(out_one, ref, atol=5e-2, rtol=5e-2), "single-block path mismatch"

    print("KERNEL_OK")
</pallas_src>

<mosaic_0001>
module attributes {stable_mosaic.version = 11 : i64} {
  func.func @_vpinn_low_kernel(%arg0: i32, %arg1: memref<16x8xf32, #tpu.memory_space<vmem>>, %arg2: memref<16x8xf32, #tpu.memory_space<vmem>>, %arg3: memref<8x32xf32, #tpu.memory_space<vmem>>, %arg4: memref<1x32xf32, #tpu.memory_space<vmem>>, %arg5: memref<32x32xf32, #tpu.memory_space<vmem>>, %arg6: memref<1x32xf32, #tpu.memory_space<vmem>>, %arg7: memref<32x32xf32, #tpu.memory_space<vmem>>, %arg8: memref<1x32xf32, #tpu.memory_space<vmem>>, %arg9: memref<32x8xf32, #tpu.memory_space<vmem>>, %arg10: memref<1x8xf32, #tpu.memory_space<vmem>>, %arg11: memref<16x8xf32, #tpu.memory_space<vmem>>) attributes {dimension_semantics = [#tpu.dimension_semantics<parallel>], iteration_bounds = array<i64: 5>, scalar_prefetch = 0 : i64, scratch_operands = 0 : i64, tpu.core_type = #tpu.core_type<tc>, window_params = [{transform_indices = @transform_0, window_bounds = array<i64: 16, 8>}, {transform_indices = @transform_1, window_bounds = array<i64: 16, 8>}, {pipeline_mode = #tpu.pipeline_mode<synchronous>, transform_indices = @transform_2, window_bounds = array<i64: 8, 32>}, {pipeline_mode = #tpu.pipeline_mode<synchronous>, transform_indices = @transform_3, window_bounds = array<i64: 1, 32>}, {pipeline_mode = #tpu.pipeline_mode<synchronous>, transform_indices = @transform_4, window_bounds = array<i64: 32, 32>}, {pipeline_mode = #tpu.pipeline_mode<synchronous>, transform_indices = @transform_5, window_bounds = array<i64: 1, 32>}, {pipeline_mode = #tpu.pipeline_mode<synchronous>, transform_indices = @transform_6, window_bounds = array<i64: 32, 32>}, {pipeline_mode = #tpu.pipeline_mode<synchronous>, transform_indices = @transform_7, window_bounds = array<i64: 1, 32>}, {pipeline_mode = #tpu.pipeline_mode<synchronous>, transform_indices = @transform_8, window_bounds = array<i64: 32, 8>}, {pipeline_mode = #tpu.pipeline_mode<synchronous>, transform_indices = @transform_9, window_bounds = array<i64: 1, 8>}, {transform_indices = @transform_10, window_bounds = array<i64: 16, 8>}]} {
    %c0 = arith.constant 0 : index
    %c0_0 = arith.constant 0 : index
    %0 = vector.load %arg1[%c0, %c0_0] : memref<16x8xf32, #tpu.memory_space<vmem>>, vector<16x8xf32>
    %c0_1 = arith.constant 0 : index
    %c0_2 = arith.constant 0 : index
    %1 = vector.load %arg4[%c0_1, %c0_2] : memref<1x32xf32, #tpu.memory_space<vmem>>, vector<1x32xf32>
    %c0_3 = arith.constant 0 : index
    %c0_4 = arith.constant 0 : index
    %2 = vector.load %arg3[%c0_3, %c0_4] : memref<8x32xf32, #tpu.memory_space<vmem>>, vector<8x32xf32>
    %cst = arith.constant dense<0.000000e+00> : vector<16x32xf32>
    %3 = tpu.matmul %0, %2, %cst {dimension_numbers = #tpu.dot_dimension_numbers<[1], [0], [0], [1], [0, 0, 1, 1], [], []>} : vector<16x8xf32>, vector<8x32xf32>, vector<16x32xf32> -> vector<16x32xf32>
    %4 = vector.broadcast %1 : vector<1x32xf32> to vector<16x32xf32>
    %5 = arith.addf %3, %4 : vector<16x32xf32>
    %cst_5 = arith.constant 5.000000e-01 : f32
    %6 = vector.broadcast %cst_5 : f32 to vector<16x32xf32>
    %7 = arith.mulf %6, %5 : vector<16x32xf32>
    %8 = math.tanh %7 : vector<16x32xf32>
    %cst_6 = arith.constant 5.000000e-01 : f32
    %9 = vector.broadcast %cst_6 : f32 to vector<16x32xf32>
    %10 = arith.mulf %9, %8 : vector<16x32xf32>
    %cst_7 = arith.constant 5.000000e-01 : f32
    %11 = vector.broadcast %cst_7 : f32 to vector<16x32xf32>
    %12 = arith.addf %10, %11 : vector<16x32xf32>
    %c0_8 = arith.constant 0 : index
    %c0_9 = arith.constant 0 : index
    %13 = vector.load %arg6[%c0_8, %c0_9] : memref<1x32xf32, #tpu.memory_space<vmem>>, vector<1x32xf32>
    %c0_10 = arith.constant 0 : index
    %c0_11 = arith.constant 0 : index
    %14 = vector.load %arg5[%c0_10, %c0_11] : memref<32x32xf32, #tpu.memory_space<vmem>>, vector<32x32xf32>
    %cst_12 = arith.constant dense<0.000000e+00> : vector<16x32xf32>
    %15 = tpu.matmul %12, %14, %cst_12 {dimension_numbers = #tpu.dot_dimension_numbers<[1], [0], [0], [1], [0, 0, 1, 1], [], []>} : vector<16x32xf32>, vector<32x32xf32>, vector<16x32xf32> -> vector<16x32xf32>
    %16 = vector.broadcast %13 : vector<1x32xf32> to vector<16x32xf32>
    %17 = arith.addf %15, %16 : vector<16x32xf32>
    %cst_13 = arith.constant 5.000000e-01 : f32
    %18 = vector.broadcast %cst_13 : f32 to vector<16x32xf32>
    %19 = arith.mulf %18, %17 : vector<16x32xf32>
    %20 = math.tanh %19 : vector<16x32xf32>
    %cst_14 = arith.constant 5.000000e-01 : f32
    %21 = vector.broadcast %cst_14 : f32 to vector<16x32xf32>
    %22 = arith.mulf %21, %20 : vector<16x32xf32>
    %cst_15 = arith.constant 5.000000e-01 : f32
    %23 = vector.broadcast %cst_15 : f32 to vector<16x32xf32>
    %24 = arith.addf %22, %23 : vector<16x32xf32>
    %c0_16 = arith.constant 0 : index
    %c0_17 = arith.constant 0 : index
    %25 = vector.load %arg8[%c0_16, %c0_17] : memref<1x32xf32, #tpu.memory_space<vmem>>, vector<1x32xf32>
    %c0_18 = arith.constant 0 : index
    %c0_19 = arith.constant 0 : index
    %26 = vector.load %arg7[%c0_18, %c0_19] : memref<32x32xf32, #tpu.memory_space<vmem>>, vector<32x32xf32>
    %cst_20 = arith.constant dense<0.000000e+00> : vector<16x32xf32>
    %27 = tpu.matmul %24, %26, %cst_20 {dimension_numbers = #tpu.dot_dimension_numbers<[1], [0], [0], [1], [0, 0, 1, 1], [], []>} : vector<16x32xf32>, vector<32x32xf32>, vector<16x32xf32> -> vector<16x32xf32>
    %28 = vector.broadcast %25 : vector<1x32xf32> to vector<16x32xf32>
    %29 = arith.addf %27, %28 : vector<16x32xf32>
    %cst_21 = arith.constant 5.000000e-01 : f32
    %30 = vector.broadcast %cst_21 : f32 to vector<16x32xf32>
    %31 = arith.mulf %30, %29 : vector<16x32xf32>
    %32 = math.tanh %31 : vector<16x32xf32>
    %cst_22 = arith.constant 5.000000e-01 : f32
    %33 = vector.broadcast %cst_22 : f32 to vector<16x32xf32>
    %34 = arith.mulf %33, %32 : vector<16x32xf32>
    %cst_23 = arith.constant 5.000000e-01 : f32
    %35 = vector.broadcast %cst_23 : f32 to vector<16x32xf32>
    %36 = arith.addf %34, %35 : vector<16x32xf32>
    %c0_24 = arith.constant 0 : index
    %c0_25 = arith.constant 0 : index
    %37 = vector.load %arg10[%c0_24, %c0_25] : memref<1x8xf32, #tpu.memory_space<vmem>>, vector<1x8xf32>
    %c0_26 = arith.constant 0 : index
    %c0_27 = arith.constant 0 : index
    %38 = vector.load %arg9[%c0_26, %c0_27] : memref<32x8xf32, #tpu.memory_space<vmem>>, vector<32x8xf32>
    %cst_28 = arith.constant dense<0.000000e+00> : vector<16x8xf32>
    %39 = tpu.matmul %36, %38, %cst_28 {dimension_numbers = #tpu.dot_dimension_numbers<[1], [0], [0], [1], [0, 0, 1, 1], [], []>} : vector<16x32xf32>, vector<32x8xf32>, vector<16x8xf32> -> vector<16x8xf32>
    %40 = vector.broadcast %37 : vector<1x8xf32> to vector<16x8xf32>
    %41 = arith.addf %39, %40 : vector<16x8xf32>
    %cst_29 = arith.constant 5.000000e-01 : f32
    %42 = vector.broadcast %cst_29 : f32 to vector<16x8xf32>
    %43 = arith.mulf %42, %41 : vector<16x8xf32>
    %44 = math.tanh %43 : vector<16x8xf32>
    %cst_30 = arith.constant 5.000000e-01 : f32
    %45 = vector.broadcast %cst_30 : f32 to vector<16x8xf32>
    %46 = arith.mulf %45, %44 : vector<16x8xf32>
    %cst_31 = arith.constant 5.000000e-01 : f32
    %47 = vector.broadcast %cst_31 : f32 to vector<16x8xf32>
    %48 = arith.addf %46, %47 : vector<16x8xf32>
    %c0_32 = arith.constant 0 : index
    %c0_33 = arith.constant 0 : index
    %49 = vector.load %arg2[%c0_32, %c0_33] : memref<16x8xf32, #tpu.memory_space<vmem>>, vector<16x8xf32>
    %50 = arith.addf %49, %48 : vector<16x8xf32>
    %c0_34 = arith.constant 0 : index
    %c0_35 = arith.constant 0 : index
    %51 = vector.load %arg11[%c0_34, %c0_35] : memref<16x8xf32, #tpu.memory_space<vmem>>, vector<16x8xf32>
    tpu.vector_store %arg11[%c0_34, %c0_35], %50 {strides = array<i32>} : memref<16x8xf32, #tpu.memory_space<vmem>>, vector<16x8xf32>,
    return
  }
  func.func @transform_0(%arg0: i32) -> (i32, i32) {
    %c0_i32 = arith.constant 0 : i32
    %c0_i32_0 = arith.constant 0 : i32
    return %arg0, %c0_i32 : i32, i32
  }
  func.func @transform_1(%arg0: i32) -> (i32, i32) {
    %c0_i32 = arith.constant 0 : i32
    %c0_i32_0 = arith.constant 0 : i32
    return %arg0, %c0_i32 : i32, i32
  }
  func.func @transform_2(%arg0: i32) -> (i32, i32) {
    %c0_i32 = arith.constant 0 : i32
    %c0_i32_0 = arith.constant 0 : i32
    %c0_i32_1 = arith.constant 0 : i32
    return %c0_i32, %c0_i32_0 : i32, i32
  }
  func.func @transform_3(%arg0: i32) -> (i32, i32) {
    %c0_i32 = arith.constant 0 : i32
    %c0_i32_0 = arith.constant 0 : i32
    %c0_i32_1 = arith.constant 0 : i32
    return %c0_i32, %c0_i32_0 : i32, i32
  }
  func.func @transform_4(%arg0: i32) -> (i32, i32) {
    %c0_i32 = arith.constant 0 : i32
    %c0_i32_0 = arith.constant 0 : i32
    %c0_i32_1 = arith.constant 0 : i32
    return %c0_i32, %c0_i32_0 : i32, i32
  }
  func.func @transform_5(%arg0: i32) -> (i32, i32) {
    %c0_i32 = arith.constant 0 : i32
    %c0_i32_0 = arith.constant 0 : i32
    %c0_i32_1 = arith.constant 0 : i32
    return %c0_i32, %c0_i32_0 : i32, i32
  }
  func.func @transform_6(%arg0: i32) -> (i32, i32) {
    %c0_i32 = arith.constant 0 : i32
    %c0_i32_0 = arith.constant 0 : i32
    %c0_i32_1 = arith.constant 0 : i32
    return %c0_i32, %c0_i32_0 : i32, i32
  }
  func.func @transform_7(%arg0: i32) -> (i32, i32) {
    %c0_i32 = arith.constant 0 : i32
    %c0_i32_0 = arith.constant 0 : i32
    %c0_i32_1 = arith.constant 0 : i32
    return %c0_i32, %c0_i32_0 : i32, i32
  }
  func.func @transform_8(%arg0: i32) -> (i32, i32) {
    %c0_i32 = arith.constant 0 : i32
    %c0_i32_0 = arith.constant 0 : i32
    %c0_i32_1 = arith.constant 0 : i32
    return %c0_i32, %c0_i32_0 : i32, i32
  }
  func.func @transform_9(%arg0: i32) -> (i32, i32) {
    %c0_i32 = arith.constant 0 : i32
    %c0_i32_0 = arith.constant 0 : i32
    %c0_i32_1 = arith.constant 0 : i32
    return %c0_i32, %c0_i32_0 : i32, i32
  }
  func.func @transform_10(%arg0: i32) -> (i32, i32) {
    %c0_i32 = arith.constant 0 : i32
    %c0_i32_0 = arith.constant 0 : i32
    return %arg0, %c0_i32 : i32, i32
  }
}

</mosaic_0001>

<llo_original>
// kernel: tpu_custom_call.1
$region0: #{tpu_custom_call.1}
  #allocation0 [shape = 'u32[]', space=smem, size = 0x4, offset = 0x4, fixed_abs, tag = 'smem constant byte address 0x4 - core index']
  #allocation1 [shape = 'u32[144,128]{1,0:T(1,128)}', space=vmem, size = 0x12000, scoped, tag = 'internal scratch']
  %s0 = inlined_call_operand.vmem [shape: f32[80,8], index: 0, kind: input, shape index: {}]
  %s1 = inlined_call_operand.vmem [shape: f32[80,8], index: 1, kind: input, shape index: {}]
  %s2 = inlined_call_operand.vmem [shape: f32[8,32], index: 2, kind: input, shape index: {}]
  %s3 = inlined_call_operand.vmem [shape: f32[1,32], index: 3, kind: input, shape index: {}]
  %s4 = inlined_call_operand.vmem [shape: f32[32,32], index: 4, kind: input, shape index: {}]
  %s5 = inlined_call_operand.vmem [shape: f32[1,32], index: 5, kind: input, shape index: {}]
  %s6 = inlined_call_operand.vmem [shape: f32[32,32], index: 6, kind: input, shape index: {}]
  %s7 = inlined_call_operand.vmem [shape: f32[1,32], index: 7, kind: input, shape index: {}]
  %s8 = inlined_call_operand.vmem [shape: f32[32,8], index: 8, kind: input, shape index: {}]
  %s9 = inlined_call_operand.vmem [shape: f32[1,8], index: 9, kind: input, shape index: {}]
  %s10 = inlined_call_operand.vmem [shape: f32[80,8], index: 10, kind: output, shape index: {}]
  %s11 = sld [smem:[#allocation0]]
  $region73: #{tpu_custom_call.1} parent=0
    _
  %s13 = ssub.s32 1, %s11
  %s14 = scalar_select 0, %s13, %s11
  loop: start=0, step=1, limit=7
  $region2: #{tpu_custom_call.1} parent=0 // loop_pre_header
    _
  $region3: #{tpu_custom_call.1} parent=0 // loop_header
    %s16 = sphi 0, %s20
    %p17 = scmp.ge.s32.totalorder %s16, 7
    %s26 = sphi 0, %s28
    %s29 = sphi 0, %s26
    %s30 = sphi 0, %s29
    %s46 = sphi 0, %s30
    %s52 = sphi 0, %s54
    %s55 = sphi 0, %s52
    %s56 = sphi 0, %s55
    %s72 = sphi 0, %s56
    %s76 = sphi 0, %s76
    %s78 = sphi 0, %s76
    %s79 = sphi 0, %s78
    %s93 = sphi 0, %s79
    %s97 = sphi 0, %s97
    %s99 = sphi 0, %s97
    %s100 = sphi 0, %s99
    %s114 = sphi 0, %s100
    %s118 = sphi 0, %s118
    %s120 = sphi 0, %s118
    %s121 = sphi 0, %s120
    %s135 = sphi 0, %s121
    %s139 = sphi 0, %s139
    %s141 = sphi 0, %s139
    %s142 = sphi 0, %s141
    %s156 = sphi 0, %s142
    %s160 = sphi 0, %s160
    %s162 = sphi 0, %s160
    %s163 = sphi 0, %s162
    %s177 = sphi 0, %s163
    %s181 = sphi 0, %s181
    %s183 = sphi 0, %s181
    %s184 = sphi 0, %s183
    %s198 = sphi 0, %s184
    %s202 = sphi 0, %s202
    %s204 = sphi 0, %s202
    %s205 = sphi 0, %s204
    %s219 = sphi 0, %s205
    %s223 = sphi 0, %s223
    %s225 = sphi 0, %s223
    %s226 = sphi 0, %s225
    %s240 = sphi 0, %s226
    %s246 = sphi 0, %s248
    %s249 = sphi 0, %s246
    %s250 = sphi 0, %s249
    %s266 = sphi 0, %s250
  $region4: #{tpu_custom_call.1} parent=0 // loop_header_branch
    %19 = sbr.rel (%p17) target = $region8
  $region5: #{tpu_custom_call.1} parent=0 // loop_body
    %s21 = ssub.s32 %s16, 1
    %s22 = ssub.s32 %s16, 2
    %s23 = sadd.s32 %s16, 1
    %s24 = ssub.s32 %s16, %s23
    %p25 = scmp.eq.s32.totalorder %s24, 0
    %s27 = sadd.s32 %s26, 1
    %s28 = scalar_select %p25, %s26, %s27
    %p31 = pneg %p25
    %p32 = scmp.eq.s32.totalorder %s16, 4
    %p33 = por %p31, %p32
    %p34 = scmp.ne.s32.totalorder %s26, %s29
    %p35 = scmp.eq.s32.totalorder %s16, 0
    %p36 = por %p34, %p35
    %p37 = scmp.ne.s32.totalorder %s26, %s29
    %p38 = scmp.eq.s32.totalorder %s21, 4
    %p39 = por %p37, %p38
    %p40 = scmp.ne.s32.totalorder %s29, %s30
    %p41 = scmp.eq.s32.totalorder %s21, 0
    %p42 = por %p40, %p41
    %p43 = scmp.ne.s32.totalorder %s29, %s30
    %p44 = scmp.eq.s32.totalorder %s22, 4
    %p45 = por %p43, %p44
    %p47 = scmp.ne.s32.totalorder %s30, %s46
    %p48 = scmp.eq.s32.totalorder %s22, 0
    %p49 = por %p47, %p48
    %s50 = ssub.s32 %s16, %s23
    %p51 = scmp.eq.s32.totalorder %s50, 0
    %s53 = sadd.s32 %s52, 1
    %s54 = scalar_select %p51, %s52, %s53
    %p57 = pneg %p51
    %p58 = scmp.eq.s32.totalorder %s16, 4
    %p59 = por %p57, %p58
    %p60 = scmp.ne.s32.totalorder %s52, %s55
    %p61 = scmp.eq.s32.totalorder %s16, 0
    %p62 = por %p60, %p61
    %p63 = scmp.ne.s32.totalorder %s52, %s55
    %p64 = scmp.eq.s32.totalorder %s21, 4
    %p65 = por %p63, %p64
    %p66 = scmp.ne.s32.totalorder %s55, %s56
    %p67 = scmp.eq.s32.totalorder %s21, 0
    %p68 = por %p66, %p67
    %p69 = scmp.ne.s32.totalorder %s55, %s56
    %p70 = scmp.eq.s32.totalorder %s22, 4
    %p71 = por %p69, %p70
    %p73 = scmp.ne.s32.totalorder %s56, %s72
    %p74 = scmp.eq.s32.totalorder %s22, 0
    %p75 = por %p73, %p74
    %s77 = sadd.s32 %s76, 1
    %p80 = scmp.eq.s32.totalorder %s16, 4
    %p81 = scmp.ne.s32.totalorder %s76, %s78
    %p82 = scmp.eq.s32.totalorder %s16, 0
    %p83 = por %p81, %p82
    %p84 = scmp.ne.s32.totalorder %s76, %s78
    %p85 = scmp.eq.s32.totalorder %s21, 4
    %p86 = por %p84, %p85
    %p87 = scmp.ne.s32.totalorder %s78, %s79
    %p88 = scmp.eq.s32.totalorder %s21, 0
    %p89 = por %p87, %p88
    %p90 = scmp.ne.s32.totalorder %s78, %s79
    %p91 = scmp.eq.s32.totalorder %s22, 4
    %p92 = por %p90, %p91
    %p94 = scmp.ne.s32.totalorder %s79, %s93
    %p95 = scmp.eq.s32.totalorder %s22, 0
    %p96 = por %p94, %p95
    %s98 = sadd.s32 %s97, 1
    %p101 = scmp.eq.s32.totalorder %s16, 4
    %p102 = scmp.ne.s32.totalorder %s97, %s99
    %p103 = scmp.eq.s32.totalorder %s16, 0
    %p104 = por %p102, %p103
    %p105 = scmp.ne.s32.totalorder %s97, %s99
    %p106 = scmp.eq.s32.totalorder %s21, 4
    %p107 = por %p105, %p106
    %p108 = scmp.ne.s32.totalorder %s99, %s100
    %p109 = scmp.eq.s32.totalorder %s21, 0
    %p110 = por %p108, %p109
    %p111 = scmp.ne.s32.totalorder %s99, %s100
    %p112 = scmp.eq.s32.totalorder %s22, 4
    %p113 = por %p111, %p112
    %p115 = scmp.ne.s32.totalorder %s100, %s114
    %p116 = scmp.eq.s32.totalorder %s22, 0
    %p117 = por %p115, %p116
    %s119 = sadd.s32 %s118, 1
    %p122 = scmp.eq.s32.totalorder %s16, 4
    %p123 = scmp.ne.s32.totalorder %s118, %s120
    %p124 = scmp.eq.s32.totalorder %s16, 0
    %p125 = por %p123, %p124
    %p126 = scmp.ne.s32.totalorder %s118, %s120
    %p127 = scmp.eq.s32.totalorder %s21, 4
    %p128 = por %p126, %p127
    %p129 = scmp.ne.s32.totalorder %s120, %s121
    %p130 = scmp.eq.s32.totalorder %s21, 0
    %p131 = por %p129, %p130
    %p132 = scmp.ne.s32.totalorder %s120, %s121
    %p133 = scmp.eq.s32.totalorder %s22, 4
    %p134 = por %p132, %p133
    %p136 = scmp.ne.s32.totalorder %s121, %s135
    %p137 = scmp.eq.s32.totalorder %s22, 0
    %p138 = por %p136, %p137
    %s140 = sadd.s32 %s139, 1
    %p143 = scmp.eq.s32.totalorder %s16, 4
    %p144 = scmp.ne.s32.totalorder %s139, %s141
    %p145 = scmp.eq.s32.totalorder %s16, 0
    %p146 = por %p144, %p145
    %p147 = scmp.ne.s32.totalorder %s139, %s141
    %p148 = scmp.eq.s32.totalorder %s21, 4
    %p149 = por %p147, %p148
    %p150 = scmp.ne.s32.totalorder %s141, %s142
    %p151 = scmp.eq.s32.totalorder %s21, 0
    %p152 = por %p150, %p151
    %p153 = scmp.ne.s32.totalorder %s141, %s142
    %p154 = scmp.eq.s32.totalorder %s22, 4
    %p155 = por %p153, %p154
    %p157 = scmp.ne.s32.totalorder %s142, %s156
    %p158 = scmp.eq.s32.totalorder %s22, 0
    %p159 = por %p157, %p158
    %s161 = sadd.s32 %s160, 1
    %p164 = scmp.eq.s32.totalorder %s16, 4
    %p165 = scmp.ne.s32.totalorder %s160, %s162
    %p166 = scmp.eq.s32.totalorder %s16, 0
    %p167 = por %p165, %p166
    %p168 = scmp.ne.s32.totalorder %s160, %s162
    %p169 = scmp.eq.s32.totalorder %s21, 4
    %p170 = por %p168, %p169
    %p171 = scmp.ne.s32.totalorder %s162, %s163
    %p172 = scmp.eq.s32.totalorder %s21, 0
    %p173 = por %p171, %p172
    %p174 = scmp.ne.s32.totalorder %s162, %s163
    %p175 = scmp.eq.s32.totalorder %s22, 4
    %p176 = por %p174, %p175
    %p178 = scmp.ne.s32.totalorder %s163, %s177
    %p179 = scmp.eq.s32.totalorder %s22, 0
    %p180 = por %p178, %p179
    %s182 = sadd.s32 %s181, 1
    %p185 = scmp.eq.s32.totalorder %s16, 4
    %p186 = scmp.ne.s32.totalorder %s181, %s183
    %p187 = scmp.eq.s32.totalorder %s16, 0
    %p188 = por %p186, %p187
    %p189 = scmp.ne.s32.totalorder %s181, %s183
    %p190 = scmp.eq.s32.totalorder %s21, 4
    %p191 = por %p189, %p190
    %p192 = scmp.ne.s32.totalorder %s183, %s184
    %p193 = scmp.eq.s32.totalorder %s21, 0
    %p194 = por %p192, %p193
    %p195 = scmp.ne.s32.totalorder %s183, %s184
    %p196 = scmp.eq.s32.totalorder %s22, 4
    %p197 = por %p195, %p196
    %p199 = scmp.ne.s32.totalorder %s184, %s198
    %p200 = scmp.eq.s32.totalorder %s22, 0
    %p201 = por %p199, %p200
    %s203 = sadd.s32 %s202, 1
    %p206 = scmp.eq.s32.totalorder %s16, 4
    %p207 = scmp.ne.s32.totalorder %s202, %s204
    %p208 = scmp.eq.s32.totalorder %s16, 0
    %p209 = por %p207, %p208
    %p210 = scmp.ne.s32.totalorder %s202, %s204
    %p211 = scmp.eq.s32.totalorder %s21, 4
    %p212 = por %p210, %p211
    %p213 = scmp.ne.s32.totalorder %s204, %s205
    %p214 = scmp.eq.s32.totalorder %s21, 0
    %p215 = por %p213, %p214
    %p216 = scmp.ne.s32.totalorder %s204, %s205
    %p217 = scmp.eq.s32.totalorder %s22, 4
    %p218 = por %p216, %p217
    %p220 = scmp.ne.s32.totalorder %s205, %s219
    %p221 = scmp.eq.s32.totalorder %s22, 0
    %p222 = por %p220, %p221
    %s224 = sadd.s32 %s223, 1
    %p227 = scmp.eq.s32.totalorder %s16, 4
    %p228 = scmp.ne.s32.totalorder %s223, %s225
    %p229 = scmp.eq.s32.totalorder %s16, 0
    %p230 = por %p228, %p229
    %p231 = scmp.ne.s32.totalorder %s223, %s225
    %p232 = scmp.eq.s32.totalorder %s21, 4
    %p233 = por %p231, %p232
    %p234 = scmp.ne.s32.totalorder %s225, %s226
    %p235 = scmp.eq.s32.totalorder %s21, 0
    %p236 = por %p234, %p235
    %p237 = scmp.ne.s32.totalorder %s225, %s226
    %p238 = scmp.eq.s32.totalorder %s22, 4
    %p239 = por %p237, %p238
    %p241 = scmp.ne.s32.totalorder %s226, %s240
    %p242 = scmp.eq.s32.totalorder %s22, 0
    %p243 = por %p241, %p242
    %s244 = ssub.s32 %s16, %s23
    %p245 = scmp.eq.s32.totalorder %s244, 0
    %s247 = sadd.s32 %s246, 1
    %s248 = scalar_select %p245, %s246, %s247
    %p251 = pneg %p245
    %p252 = scmp.eq.s32.totalorder %s16, 4
    %p253 = por %p251, %p252
    %p254 = scmp.ne.s32.totalorder %s246, %s249
    %p255 = scmp.eq.s32.totalorder %s16, 0
    %p256 = por %p254, %p255
    %p257 = scmp.ne.s32.totalorder %s246, %s249
    %p258 = scmp.eq.s32.totalorder %s21, 4
    %p259 = por %p257, %p258
    %p260 = scmp.ne.s32.totalorder %s249, %s250
    %p261 = scmp.eq.s32.totalorder %s21, 0
    %p262 = por %p260, %p261
    %p263 = scmp.ne.s32.totalorder %s249, %s250
    %p264 = scmp.eq.s32.totalorder %s22, 4
    %p265 = por %p263, %p264
    %p267 = scmp.ne.s32.totalorder %s250, %s266
    %p268 = scmp.eq.s32.totalorder %s22, 0
    %p269 = por %p267, %p268
    %p270 = scmp.le.s32.totalorder 1, %s16
    %p271 = scmp.lt.s32.totalorder %s16, 6
    %p272 = pnand %p270, %p271
    %p273 = pneg %p272
    // Predicated region
    $region9: #{tpu_custom_call.1} parent=5 // pred_check
      _
    $region10: #{tpu_custom_call.1} parent=5 // pred_check_branch
      %275 = sbr.rel (%p272) target = $region12
    $region11: #{tpu_custom_call.1} parent=5 // pred_region
      %s276 = ssub.s32 %s16, 1
      // Predicated region
      $region13: #{tpu_custom_call.1} parent=11 // pred_check
        %p277 = pneg %p89
      $region14: #{tpu_custom_call.1} parent=11 // pred_check_branch
        %279 = sbr.rel (%p277) target = $region16
      $region15: #{tpu_custom_call.1} parent=11 // pred_region
        _
      $region16: #{tpu_custom_call.1} parent=11 // pred_fallthru
        _
      // Predicated region
      $region17: #{tpu_custom_call.1} parent=11 // pred_check
        %p280 = pneg %p110
      $region18: #{tpu_custom_call.1} parent=11 // pred_check_branch
        %282 = sbr.rel (%p280) target = $region20
      $region19: #{tpu_custom_call.1} parent=11 // pred_region
        _
      $region20: #{tpu_custom_call.1} parent=11 // pred_fallthru
        _
      // Predicated region
      $region21: #{tpu_custom_call.1} parent=11 // pred_check
        %p283 = pneg %p131
      $region22: #{tpu_custom_call.1} parent=11 // pred_check_branch
        %285 = sbr.rel (%p283) target = $region24
      $region23: #{tpu_custom_call.1} parent=11 // pred_region
        _
      $region24: #{tpu_custom_call.1} parent=11 // pred_fallthru
        _
      // Predicated region
      $region25: #{tpu_custom_call.1} parent=11 // pred_check
        %p286 = pneg %p152
      $region26: #{tpu_custom_call.1} parent=11 // pred_check_branch
        %288 = sbr.rel (%p286) target = $region28
      $region27: #{tpu_custom_call.1} parent=11 // pred_region
        _
      $region28: #{tpu_custom_call.1} parent=11 // pred_fallthru
        _
      // Predicated region
      $region29: #{tpu_custom_call.1} parent=11 // pred_check
        %p289 = pneg %p173
      $region30: #{tpu_custom_call.1} parent=11 // pred_check_branch
        %291 = sbr.rel (%p289) target = $region32
      $region31: #{tpu_custom_call.1} parent=11 // pred_region
        _
      $region32: #{tpu_custom_call.1} parent=11 // pred_fallthru
        _
      // Predicated region
      $region33: #{tpu_custom_call.1} parent=11 // pred_check
        %p292 = pneg %p194
      $region34: #{tpu_custom_call.1} parent=11 // pred_check_branch
        %294 = sbr.rel (%p292) target = $region36
      $region35: #{tpu_custom_call.1} parent=11 // pred_region
        _
      $region36: #{tpu_custom_call.1} parent=11 // pred_fallthru
        _
      // Predicated region
      $region37: #{tpu_custom_call.1} parent=11 // pred_check
        %p295 = pneg %p215
      $region38: #{tpu_custom_call.1} parent=11 // pred_check_branch
        %297 = sbr.rel (%p295) target = $region40
      $region39: #{tpu_custom_call.1} parent=11 // pred_region
        _
      $region40: #{tpu_custom_call.1} parent=11 // pred_fallthru
        _
      // Predicated region
      $region41: #{tpu_custom_call.1} parent=11 // pred_check
        %p298 = pneg %p236
      $region42: #{tpu_custom_call.1} parent=11 // pred_check_branch
        %300 = sbr.rel (%p298) target = $region44
      $region43: #{tpu_custom_call.1} parent=11 // pred_region
        _
      $region44: #{tpu_custom_call.1} parent=11 // pred_fallthru
        _
    $region12: #{tpu_custom_call.1} parent=5 // pred_fallthru
      _
    %p301 = scmp.lt.s32.totalorder %s16, 5
    // Predicated region
    $region45: #{tpu_custom_call.1} parent=5 // pred_check
      %p302 = pneg %p301
    $region46: #{tpu_custom_call.1} parent=5 // pred_check_branch
      %304 = sbr.rel (%p302) target = $region48
    $region47: #{tpu_custom_call.1} parent=5 // pred_region
      // Predicated region
      $region49: #{tpu_custom_call.1} parent=47 // pred_check
        %p305 = pneg %p36
      $region50: #{tpu_custom_call.1} parent=47 // pred_check_branch
        %307 = sbr.rel (%p305) target = $region52
      $region51: #{tpu_custom_call.1} parent=47 // pred_region
        %s308 = smul.u32 2, %s16
        %p309 = scmp.lt.s32.totalorder %s308, 9
        %s310 = scalar_select %p309, %s308, 9
        %s311 = smul.addr %s310, 8
        %s312 = scalar_lea.vmem %s0, %s311
        %s313 = smul.u32 2, %s16
      $region52: #{tpu_custom_call.1} parent=47 // pred_fallthru
        _
      // Predicated region
      $region53: #{tpu_custom_call.1} parent=47 // pred_check
        %p314 = pneg %p62
      $region54: #{tpu_custom_call.1} parent=47 // pred_check_branch
        %316 = sbr.rel (%p314) target = $region56
      $region55: #{tpu_custom_call.1} parent=47 // pred_region
        %s317 = smul.u32 2, %s16
        %p318 = scmp.lt.s32.totalorder %s317, 9
        %s319 = scalar_select %p318, %s317, 9
        %s320 = smul.addr %s319, 8
        %s321 = scalar_lea.vmem %s1, %s320
        %s322 = smul.u32 2, %s16
      $region56: #{tpu_custom_call.1} parent=47 // pred_fallthru
        _
    $region48: #{tpu_custom_call.1} parent=5 // pred_fallthru
      _
    %p323 = scmp.le.s32.totalorder 1, %s16
    %p324 = scmp.lt.s32.totalorder %s16, 6
    %p325 = pnand %p323, %p324
    %p326 = pneg %p325
    // Predicated region
    $region57: #{tpu_custom_call.1} parent=5 // pred_check
      _
    $region58: #{tpu_custom_call.1} parent=5 // pred_check_branch
      %328 = sbr.rel (%p325) target = $region60
    $region59: #{tpu_custom_call.1} parent=5 // pred_region
      %s329 = ssub.s32 %s16, 1
      %s330 = smul.u32 2, %s21
      %p331 = scmp.lt.s32.totalorder %s330, 9
      %s332 = scalar_select %p331, %s330, 9
      %s333 = smul.addr %s332, 8
      %s334 = scalar_lea.vmem %s0, %s333
      %p335 = pneg %p42
      %p336 = pneg %p39
      %s337 = smul.u32 2, %s21
      %p338 = scmp.lt.s32.totalorder %s337, 9
      %s339 = scalar_select %p338, %s337, 9
      %s340 = smul.addr %s339, 8
      %s341 = scalar_lea.vmem %s1, %s340
      %p342 = pneg %p68
      %p343 = pneg %p65
      %p344 = pneg %p89
      %p345 = pneg %p86
      %p346 = pneg %p110
      %p347 = pneg %p107
      %p348 = pneg %p131
      %p349 = pneg %p128
      %p350 = pneg %p152
      %p351 = pneg %p149
      %p352 = pneg %p173
      %p353 = pneg %p170
      %p354 = pneg %p194
      %p355 = pneg %p191
      %p356 = pneg %p215
      %p357 = pneg %p212
      %p358 = pneg %p236
      %p359 = pneg %p233
      %p360 = pneg %p262
      %p361 = pneg %p259
      %s362 = smul.u32 2, %s21
      %p363 = scmp.lt.s32.totalorder %s362, 9
      %s364 = scalar_select %p363, %s362, 9
      %s365 = smul.addr %s364, 8
      %s366 = scalar_lea.vmem %s10, %s365
      %s367 = smul.u32 2, %s21
      %p368 = scmp.lt.s32.totalorder %s367, 9
      %s369 = scalar_select %p368, %s367, 9
      %s370 = smul.addr %s369, 8
      %s371 = scalar_lea.vmem %s0, %s370
      %s372 = smul.u32 2, %s21
      %s373 = smul.u32 2, %s21
      %p374 = scmp.lt.s32.totalorder %s373, 9
      %s375 = scalar_select %p374, %s373, 9
      %s376 = smul.addr %s375, 8
      %s377 = scalar_lea.vmem %s1, %s376
      %s378 = smul.u32 2, %s21
      %s379 = smul.u32 2, %s21
      %p380 = scmp.lt.s32.totalorder %s379, 9
      %s381 = scalar_select %p380, %s379, 9
      %s382 = smul.addr %s381, 8
      %s383 = scalar_lea.vmem %s10, %s382
      %s384 = smul.u32 2, %s21
      %v385 = vld [vmem:[%s371] sm:$0xff]
      %v386 = vld [vmem:[%s371 + $0x8] sm:$0xff]
      %v387 = vld [vmem:[%s3] sm:$0x1]
      %v388 = vld [vmem:[%s2] sm:$0xff]
      %v390 = vlaneseq
      %v391 = vshrl.u32 %v390, 7
      %v392 = vsub.s32 0, %v391
      %v393 = vrot.slane %v387, %v392
      %vm395 = vcmask 64512
      %v397 = vsel %vm395, %v385, 0
      %v400 = vsel %vm395, %v386, 0
      %402 = vmatprep.subr.mxu0 0.0
      %403 = vmatpush1.msra.mxu0 %v388
      %404 = vmatprep.subr.mxu0 0.0
      %405 = vmatpush1.msra.mxu0 0.0
      %406 = vmatprep.subr.mxu0 0.0
      %407 = vmatpush1.msra.mxu0 0.0
      %408 = vmatprep.subr.mxu0 0.0
      %409 = vmatpush1.msra.mxu0 0.0
      %410 = vmatprep.subr.mxu0 0.0
      %411 = vmatpush1.msra.mxu0 0.0
      %412 = vmatprep.subr.mxu0 0.0
      %413 = vmatpush1.msra.mxu0 0.0
      %414 = vmatprep.subr.mxu0 0.0
      %415 = vmatpush1.msra.mxu0 0.0
      %416 = vmatprep.subr.mxu0 0.0
      %417 = vmatpush1.msra.mxu0 0.0
      %418 = vmatprep.subr.mxu0 0.0
      %419 = vmatpush1.msra.mxu0 0.0
      %420 = vmatprep.subr.mxu0 0.0
      %421 = vmatpush1.msra.mxu0 0.0
      %422 = vmatprep.subr.mxu0 0.0
      %423 = vmatpush1.msra.mxu0 0.0
      %424 = vmatprep.subr.mxu0 0.0
      %425 = vmatpush1.msra.mxu0 0.0
      %426 = vmatprep.subr.mxu0 0.0
      %427 = vmatpush1.msra.mxu0 0.0
      %428 = vmatprep.subr.mxu0 0.0
      %429 = vmatpush1.msra.mxu0 0.0
      %430 = vmatprep.subr.mxu0 0.0
      %431 = vmatpush1.msra.mxu0 0.0
      %432 = vmatprep.subr.mxu0 0.0
      %433 = vmatpush1.msra.mxu0 0.0
      %434 = vmatprep.subr.mxu0 0.0
      %435 = vmatpush1.msra.mxu0 0.0
      %436 = vmatprep.subr.mxu0 0.0
      %437 = vmatpush1.msra.mxu0 0.0
      %438 = vmatprep.subr.mxu0 0.0
      %439 = vmatpush1.msra.mxu0 0.0
      %440 = vmatprep.subr.mxu0 0.0
      %441 = vmatpush1.msra.mxu0 0.0
      %442 = vmatprep.subr.mxu0 0.0
      %443 = vmatpush1.msra.mxu0 0.0
      %444 = vmatprep.subr.mxu0 0.0
      %445 = vmatpush1.msra.mxu0 0.0
      %446 = vmatprep.subr.mxu0 0.0
      %447 = vmatpush1.msra.mxu0 0.0
      %448 = vmatprep.subr.mxu0 0.0
      %449 = vmatpush1.msra.mxu0 0.0
      %450 = vmatprep.subr.mxu0 0.0
      %451 = vmatpush1.msra.mxu0 0.0
      %452 = vmatprep.subr.mxu0 0.0
      %453 = vmatpush1.msra.mxu0 0.0
      %454 = vmatprep.subr.mxu0 0.0
      %455 = vmatpush1.msra.mxu0 0.0
      %456 = vmatprep.subr.mxu0 0.0
      %457 = vmatpush1.msra.mxu0 0.0
      %458 = vmatprep.subr.mxu0 0.0
      %459 = vmatpush1.msra.mxu0 0.0
      %460 = vmatprep.subr.mxu0 0.0
      %461 = vmatpush1.msra.mxu0 0.0
      %462 = vmatprep.subr.mxu0 0.0
      %463 = vmatpush1.msra.mxu0 0.0
      %464 = vmatprep.subr.mxu0 0.0
      %465 = vmatpush1.msra.mxu0 0.0
      %466 = vmatprep.mubr.f32.mxu0 0.0
      %467 = vmatmul.mubr.f32.gmra.mrb[0].mxu0 %v397
      %v468 = vpop.f32.mrb[0].mxu0
      %v469 = vadd.f32 %v393, %v468
      %v470 = vpop.f32.mrb[0].mxu0
      %471 = vmatprep.mubr.f32.mxu0 0.0
      %472 = vmatmul.mubr.f32.gmra.mrb[0].mxu0 %v400
      %v473 = vpop.f32.mrb[0].mxu0
      %v474 = vadd.f32 %v393, %v473
      %v475 = vpop.f32.mrb[0].mxu0
      %476 = vdwg.mxu0
      %v477 = vmul.f32 %v469, 0.5
      %v478 = vmul.f32 %v474, 0.5
      %v479 = vtanh.pop %v477
      %v480 = vtanh.pop %v478
      %v481 = vmul.f32 %v479, 0.5
      %v482 = vmul.f32 %v480, 0.5
      %v483 = vadd.f32 %v481, 0.5
      %v484 = vadd.f32 %v482, 0.5
      %v485 = vld [vmem:[%s5] sm:$0x1]
      %v486 = vld [vmem:[%s4] sm:$0xff]
      %v487 = vld [vmem:[%s4 + $0x8] sm:$0xff]
      %v488 = vld [vmem:[%s4 + $0x10] sm:$0xff]
      %v489 = vld [vmem:[%s4 + $0x18] sm:$0xff]
      %v491 = vlaneseq
      %v492 = vshrl.u32 %v491, 7
      %v493 = vsub.s32 0, %v492
      %v494 = vrot.slane %v485, %v493
      %vm496 = vcmask 261120
      %v498 = vsel %vm496, %v483, 0
      %v501 = vsel %vm496, %v484, 0
      %503 = vmatprep.subr.mxu0 0.0
      %504 = vmatpush1.msra.mxu0 %v486
      %505 = vmatprep.subr.mxu0 0.0
      %506 = vmatpush1.msra.mxu0 %v487
      %507 = vmatprep.subr.mxu0 0.0
      %508 = vmatpush1.msra.mxu0 %v488
      %509 = vmatprep.subr.mxu0 0.0
      %510 = vmatpush1.msra.mxu0 %v489
      %511 = vmatprep.subr.mxu0 0.0
      %512 = vmatpush1.msra.mxu0 0.0
      %513 = vmatprep.subr.mxu0 0.0
      %514 = vmatpush1.msra.mxu0 0.0
      %515 = vmatprep.subr.mxu0 0.0
      %516 = vmatpush1.msra.mxu0 0.0
      %517 = vmatprep.subr.mxu0 0.0
      %518 = vmatpush1.msra.mxu0 0.0
      %519 = vmatprep.subr.mxu0 0.0
      %520 = vmatpush1.msra.mxu0 0.0
      %521 = vmatprep.subr.mxu0 0.0
      %522 = vmatpush1.msra.mxu0 0.0
      %523 = vmatprep.subr.mxu0 0.0
      %524 = vmatpush1.msra.mxu0 0.0
      %525 = vmatprep.subr.mxu0 0.0
      %526 = vmatpush1.msra.mxu0 0.0
      %527 = vmatprep.subr.mxu0 0.0
      %528 = vmatpush1.msra.mxu0 0.0
      %529 = vmatprep.subr.mxu0 0.0
      %530 = vmatpush1.msra.mxu0 0.0
      %531 = vmatprep.subr.mxu0 0.0
      %532 = vmatpush1.msra.mxu0 0.0
      %533 = vmatprep.subr.mxu0 0.0
      %534 = vmatpush1.msra.mxu0 0.0
      %535 = vmatprep.subr.mxu0 0.0
      %536 = vmatpush1.msra.mxu0 0.0
      %537 = vmatprep.subr.mxu0 0.0
      %538 = vmatpush1.msra.mxu0 0.0
      %539 = vmatprep.subr.mxu0 0.0
      %540 = vmatpush1.msra.mxu0 0.0
      %541 = vmatprep.subr.mxu0 0.0
      %542 = vmatpush1.msra.mxu0 0.0
      %543 = vmatprep.subr.mxu0 0.0
      %544 = vmatpush1.msra.mxu0 0.0
      %545 = vmatprep.subr.mxu0 0.0
      %546 = vmatpush1.msra.mxu0 0.0
      %547 = vmatprep.subr.mxu0 0.0
      %548 = vmatpush1.msra.mxu0 0.0
      %549 = vmatprep.subr.mxu0 0.0
      %550 = vmatpush1.msra.mxu0 0.0
      %551 = vmatprep.subr.mxu0 0.0
      %552 = vmatpush1.msra.mxu0 0.0
      %553 = vmatprep.subr.mxu0 0.0
      %554 = vmatpush1.msra.mxu0 0.0
      %555 = vmatprep.subr.mxu0 0.0
      %556 = vmatpush1.msra.mxu0 0.0
      %557 = vmatprep.subr.mxu0 0.0
      %558 = vmatpush1.msra.mxu0 0.0
      %559 = vmatprep.subr.mxu0 0.0
      %560 = vmatpush1.msra.mxu0 0.0
      %561 = vmatprep.subr.mxu0 0.0
      %562 = vmatpush1.msra.mxu0 0.0
      %563 = vmatprep.subr.mxu0 0.0
      %564 = vmatpush1.msra.mxu0 0.0
      %565 = vmatprep.subr.mxu0 0.0
      %566 = vmatpush1.msra.mxu0 0.0
      %567 = vmatprep.mubr.f32.mxu0 0.0
      %568 = vmatmul.mubr.f32.gmra.mrb[0].mxu0 %v498
      %v569 = vpop.f32.mrb[0].mxu0
      %v570 = vadd.f32 %v494, %v569
      %v571 = vpop.f32.mrb[0].mxu0
      %572 = vmatprep.mubr.f32.mxu0 0.0
      %573 = vmatmul.mubr.f32.gmra.mrb[0].mxu0 %v501
      %v574 = vpop.f32.mrb[0].mxu0
      %v575 = vadd.f32 %v494, %v574
      %v576 = vpop.f32.mrb[0].mxu0
      %577 = vdwg.mxu0
      %v578 = vmul.f32 %v570, 0.5
      %v579 = vmul.f32 %v575, 0.5
      %v580 = vtanh.pop %v578
      %v581 = vtanh.pop %v579
      %v582 = vmul.f32 %v580, 0.5
      %v583 = vmul.f32 %v581, 0.5
      %v584 = vadd.f32 %v582, 0.5
      %v585 = vadd.f32 %v583, 0.5
      %v586 = vld [vmem:[%s7] sm:$0x1]
      %v587 = vld [vmem:[%s6] sm:$0xff]
      %v588 = vld [vmem:[%s6 + $0x8] sm:$0xff]
      %v589 = vld [vmem:[%s6 + $0x10] sm:$0xff]
      %v590 = vld [vmem:[%s6 + $0x18] sm:$0xff]
      %v592 = vlaneseq
      %v593 = vshrl.u32 %v592, 7
      %v594 = vsub.s32 0, %v593
      %v595 = vrot.slane %v586, %v594
      %v598 = vsel %vm496, %v584, 0
      %v601 = vsel %vm496, %v585, 0
      %603 = vmatprep.subr.mxu0 0.0
      %604 = vmatpush1.msra.mxu0 %v587
      %605 = vmatprep.subr.mxu0 0.0
      %606 = vmatpush1.msra.mxu0 %v588
      %607 = vmatprep.subr.mxu0 0.0
      %608 = vmatpush1.msra.mxu0 %v589
      %609 = vmatprep.subr.mxu0 0.0
      %610 = vmatpush1.msra.mxu0 %v590
      %611 = vmatprep.subr.mxu0 0.0
      %612 = vmatpush1.msra.mxu0 0.0
      %613 = vmatprep.subr.mxu0 0.0
      %614 = vmatpush1.msra.mxu0 0.0
      %615 = vmatprep.subr.mxu0 0.0
      %616 = vmatpush1.msra.mxu0 0.0
      %617 = vmatprep.subr.mxu0 0.0
      %618 = vmatpush1.msra.mxu0 0.0
      %619 = vmatprep.subr.mxu0 0.0
      %620 = vmatpush1.msra.mxu0 0.0
      %621 = vmatprep.subr.mxu0 0.0
      %622 = vmatpush1.msra.mxu0 0.0
      %623 = vmatprep.subr.mxu0 0.0
      %624 = vmatpush1.msra.mxu0 0.0
      %625 = vmatprep.subr.mxu0 0.0
      %626 = vmatpush1.msra.mxu0 0.0
      %627 = vmatprep.subr.mxu0 0.0
      %628 = vmatpush1.msra.mxu0 0.0
      %629 = vmatprep.subr.mxu0 0.0
      %630 = vmatpush1.msra.mxu0 0.0
      %631 = vmatprep.subr.mxu0 0.0
      %632 = vmatpush1.msra.mxu0 0.0
      %633 = vmatprep.subr.mxu0 0.0
      %634 = vmatpush1.msra.mxu0 0.0
      %635 = vmatprep.subr.mxu0 0.0
      %636 = vmatpush1.msra.mxu0 0.0
      %637 = vmatprep.subr.mxu0 0.0
      %638 = vmatpush1.msra.mxu0 0.0
      %639 = vmatprep.subr.mxu0 0.0
      %640 = vmatpush1.msra.mxu0 0.0
      %641 = vmatprep.subr.mxu0 0.0
      %642 = vmatpush1.msra.mxu0 0.0
      %643 = vmatprep.subr.mxu0 0.0
      %644 = vmatpush1.msra.mxu0 0.0
      %645 = vmatprep.subr.mxu0 0.0
      %646 = vmatpush1.msra.mxu0 0.0
      %647 = vmatprep.subr.mxu0 0.0
      %648 = vmatpush1.msra.mxu0 0.0
      %649 = vmatprep.subr.mxu0 0.0
      %650 = vmatpush1.msra.mxu0 0.0
      %651 = vmatprep.subr.mxu0 0.0
      %652 = vmatpush1.msra.mxu0 0.0
      %653 = vmatprep.subr.mxu0 0.0
      %654 = vmatpush1.msra.mxu0 0.0
      %655 = vmatprep.subr.mxu0 0.0
      %656 = vmatpush1.msra.mxu0 0.0
      %657 = vmatprep.subr.mxu0 0.0
      %658 = vmatpush1.msra.mxu0 0.0
      %659 = vmatprep.subr.mxu0 0.0
      %660 = vmatpush1.msra.mxu0 0.0
      %661 = vmatprep.subr.mxu0 0.0
      %662 = vmatpush1.msra.mxu0 0.0
      %663 = vmatprep.subr.mxu0 0.0
      %664 = vmatpush1.msra.mxu0 0.0
      %665 = vmatprep.subr.mxu0 0.0
      %666 = vmatpush1.msra.mxu0 0.0
      %667 = vmatprep.mubr.f32.mxu0 0.0
      %668 = vmatmul.mubr.f32.gmra.mrb[0].mxu0 %v598
      %v669 = vpop.f32.mrb[0].mxu0
      %v670 = vadd.f32 %v595, %v669
      %v671 = vpop.f32.mrb[0].mxu0
      %672 = vmatprep.mubr.f32.mxu0 0.0
      %673 = vmatmul.mubr.f32.gmra.mrb[0].mxu0 %v601
      %v674 = vpop.f32.mrb[0].mxu0
      %v675 = vadd.f32 %v595, %v674
      %v676 = vpop.f32.mrb[0].mxu0
      %677 = vdwg.mxu0
      %v678 = vmul.f32 %v670, 0.5
      %v679 = vmul.f32 %v675, 0.5
      %v680 = vtanh.pop %v678
      %v681 = vtanh.pop %v679
      %v682 = vmul.f32 %v680, 0.5
      %v683 = vmul.f32 %v681, 0.5
      %v684 = vadd.f32 %v682, 0.5
      %v685 = vadd.f32 %v683, 0.5
      %v686 = vld [vmem:[%s9] sm:$0x1]
      %v687 = vld [vmem:[%s8] sm:$0xff]
      %v688 = vld [vmem:[%s8 + $0x8] sm:$0xff]
      %v689 = vld [vmem:[%s8 + $0x10] sm:$0xff]
      %v690 = vld [vmem:[%s8 + $0x18] sm:$0xff]
      %v692 = vlaneseq
      %v693 = vshrl.u32 %v692, 7
      %v694 = vsub.s32 0, %v693
      %v695 = vrot.slane %v686, %v694
      %v698 = vsel %vm496, %v684, 0
      %v701 = vsel %vm496, %v685, 0
      %703 = vmatprep.subr.mxu0 0.0
      %704 = vmatpush1.msra.mxu0 %v687
      %705 = vmatprep.subr.mxu0 0.0
      %706 = vmatpush1.msra.mxu0 %v688
      %707 = vmatprep.subr.mxu0 0.0
      %708 = vmatpush1.msra.mxu0 %v689
      %709 = vmatprep.subr.mxu0 0.0
      %710 = vmatpush1.msra.mxu0 %v690
      %711 = vmatprep.subr.mxu0 0.0
      %712 = vmatpush1.msra.mxu0 0.0
      %713 = vmatprep.subr.mxu0 0.0
      %714 = vmatpush1.msra.mxu0 0.0
      %715 = vmatprep.subr.mxu0 0.0
      %716 = vmatpush1.msra.mxu0 0.0
      %717 = vmatprep.subr.mxu0 0.0
      %718 = vmatpush1.msra.mxu0 0.0
      %719 = vmatprep.subr.mxu0 0.0
      %720 = vmatpush1.msra.mxu0 0.0
      %721 = vmatprep.subr.mxu0 0.0
      %722 = vmatpush1.msra.mxu0 0.0
      %723 = vmatprep.subr.mxu0 0.0
      %724 = vmatpush1.msra.mxu0 0.0
      %725 = vmatprep.subr.mxu0 0.0
      %726 = vmatpush1.msra.mxu0 0.0
      %727 = vmatprep.subr.mxu0 0.0
      %728 = vmatpush1.msra.mxu0 0.0
      %729 = vmatprep.subr.mxu0 0.0
      %730 = vmatpush1.msra.mxu0 0.0
      %731 = vmatprep.subr.mxu0 0.0
      %732 = vmatpush1.msra.mxu0 0.0
      %733 = vmatprep.subr.mxu0 0.0
      %734 = vmatpush1.msra.mxu0 0.0
      %735 = vmatprep.subr.mxu0 0.0
      %736 = vmatpush1.msra.mxu0 0.0
      %737 = vmatprep.subr.mxu0 0.0
      %738 = vmatpush1.msra.mxu0 0.0
      %739 = vmatprep.subr.mxu0 0.0
      %740 = vmatpush1.msra.mxu0 0.0
      %741 = vmatprep.subr.mxu0 0.0
      %742 = vmatpush1.msra.mxu0 0.0
      %743 = vmatprep.subr.mxu0 0.0
      %744 = vmatpush1.msra.mxu0 0.0
      %745 = vmatprep.subr.mxu0 0.0
      %746 = vmatpush1.msra.mxu0 0.0
      %747 = vmatprep.subr.mxu0 0.0
      %748 = vmatpush1.msra.mxu0 0.0
      %749 = vmatprep.subr.mxu0 0.0
      %750 = vmatpush1.msra.mxu0 0.0
      %751 = vmatprep.subr.mxu0 0.0
      %752 = vmatpush1.msra.mxu0 0.0
      %753 = vmatprep.subr.mxu0 0.0
      %754 = vmatpush1.msra.mxu0 0.0
      %755 = vmatprep.subr.mxu0 0.0
      %756 = vmatpush1.msra.mxu0 0.0
      %757 = vmatprep.subr.mxu0 0.0
      %758 = vmatpush1.msra.mxu0 0.0
      %759 = vmatprep.subr.mxu0 0.0
      %760 = vmatpush1.msra.mxu0 0.0
      %761 = vmatprep.subr.mxu0 0.0
      %762 = vmatpush1.msra.mxu0 0.0
      %763 = vmatprep.subr.mxu0 0.0
      %764 = vmatpush1.msra.mxu0 0.0
      %765 = vmatprep.subr.mxu0 0.0
      %766 = vmatpush1.msra.mxu0 0.0
      %767 = vmatprep.mubr.f32.mxu0 0.0
      %768 = vmatmul.mubr.f32.gmra.mrb[0].mxu0 %v698
      %v769 = vpop.f32.mrb[0].mxu0
      %v770 = vadd.f32 %v695, %v769
      %v771 = vpop.f32.mrb[0].mxu0
      %772 = vmatprep.mubr.f32.mxu0 0.0
      %773 = vmatmul.mubr.f32.gmra.mrb[0].mxu0 %v701
      %v774 = vpop.f32.mrb[0].mxu0
      %v775 = vadd.f32 %v695, %v774
      %v776 = vpop.f32.mrb[0].mxu0
      %777 = vdwg.mxu0
      %v778 = vmul.f32 %v770, 0.5
      %v779 = vmul.f32 %v775, 0.5
      %v780 = vtanh.pop %v778
      %v781 = vtanh.pop %v779
      %v782 = vmul.f32 %v780, 0.5
      %v783 = vmul.f32 %v781, 0.5
      %v784 = vadd.f32 %v782, 0.5
      %v785 = vadd.f32 %v783, 0.5
      %v786 = vld [vmem:[%s377] sm:$0xff]
      %v787 = vld [vmem:[%s377 + $0x8] sm:$0xff]
      %v788 = vadd.f32 %v786, %v784
      %v789 = vadd.f32 %v787, %v785
      %790 = vst.msk [vmem:[%s383] sm:$0xff] %vm395, %v788
      %791 = vst.msk [vmem:[%s383 + $0x8] sm:$0xff] %vm395, %v789
      %s792 = smul.u32 2, %s21
      %p793 = scmp.lt.s32.totalorder %s792, 9
      %s794 = scalar_select %p793, %s792, 9
      %s795 = smul.addr %s794, 8
      %s796 = scalar_lea.vmem %s10, %s795
      // Predicated region
      $region61: #{tpu_custom_call.1} parent=59 // pred_check
        %p797 = pneg %p259
      $region62: #{tpu_custom_call.1} parent=59 // pred_check_branch
        %799 = sbr.rel (%p797) target = $region64
      $region63: #{tpu_custom_call.1} parent=59 // pred_region
        %s800 = smul.u32 2, %s21
      $region64: #{tpu_custom_call.1} parent=59 // pred_fallthru
        _
    $region60: #{tpu_custom_call.1} parent=5 // pred_fallthru
      _
    %p801 = scmp.le.s32.totalorder 2, %s16
    // Predicated region
    $region65: #{tpu_custom_call.1} parent=5 // pred_check
      %p802 = pneg %p801
    $region66: #{tpu_custom_call.1} parent=5 // pred_check_branch
      %804 = sbr.rel (%p802) target = $region68
    $region67: #{tpu_custom_call.1} parent=5 // pred_region
      %s805 = ssub.s32 %s16, 2
      // Predicated region
      $region69: #{tpu_custom_call.1} parent=67 // pred_check
        %p806 = pneg %p265
      $region70: #{tpu_custom_call.1} parent=67 // pred_check_branch
        %808 = sbr.rel (%p806) target = $region72
      $region71: #{tpu_custom_call.1} parent=67 // pred_region
        %s809 = smul.u32 2, %s22
        %p810 = scmp.lt.s32.totalorder %s809, 9
        %s811 = scalar_select %p810, %s809, 9
        %s812 = smul.addr %s811, 8
        %s813 = scalar_lea.vmem %s10, %s812
      $region72: #{tpu_custom_call.1} parent=67 // pred_fallthru
        _
    $region68: #{tpu_custom_call.1} parent=5 // pred_fallthru
      _
  $region6: #{tpu_custom_call.1} parent=0 // loop_footer
    %s20 = sadd.s32 1, %s16
  $region7: #{tpu_custom_call.1} parent=0 // loop_footer_branch
    %15 = sbr.rel target = $region3
  $region8: #{tpu_custom_call.1} parent=0 // loop_exit
    _

</llo_original>
